<compile_context>
chip_gen: v5e
topology: v5e:2x2
jax: 0.10.0
libtpu: 0.0.40
codegen_flags: <defaults>
</compile_context>

<pallas_src>
import functools

import jax
import jax.numpy as jnp
import numpy as np
from jax.experimental import pallas as pl
from jax.experimental.pallas import tpu as pltpu


def _resblock_kernel(xT_ref, w1_ref, g1_ref, b1_ref, w2_ref, g2_ref, b2_ref,
                     wsT_ref, bs_ref, out_ref, *, H, W):
    """Channel-major residual block; every activation is [C, N*H*W] (lanes = pixels)."""
    eps = 1e-5
    Cout, NM = out_ref.shape
    inv_m = 1.0 / NM

    # Pixel coordinates along the lane axis: nm = n*H*W + y*W + x.
    col = jax.lax.broadcasted_iota(jnp.int32, (1, NM), 1)
    if (W & (W - 1)) == 0 and (H & (H - 1)) == 0:            # powers of two -> shift/and
        xx = jnp.bitwise_and(col, W - 1)
        yy = jnp.bitwise_and(jnp.right_shift(col, W.bit_length() - 1), H - 1)
    else:
        xx = col % W
        yy = (col // W) % H

    offsets = [(ky - 1, kx - 1) for ky in range(3) for kx in range(3)]
    masks = [((yy + dy >= 0) & (yy + dy < H) & (xx + dx >= 0) & (xx + dx < W))
             for dy, dx in offsets]

    def windows(aT):
        """[C, NM] -> [9*C, NM]: the 9 shifted 3x3 taps, zero-masked at spatial borders."""
        nm = aT.shape[1]
        taps = []
        for k, (dy, dx) in enumerate(offsets):
            if dy == 0 and dx == 0:
                taps.append(aT)                              # center tap: no shift, no mask
            else:
                shifted = pltpu.roll(aT, (-(dy * W + dx)) % nm, axis=1)   # XLU lane rotate
                taps.append(jnp.where(masks[k], shifted, 0.0))
        return jnp.concatenate(taps, axis=0)                 # sublane-aligned stack

    def bn_scale_shift(acc, g, b):
        """Training-mode BN folded into scale/shift; one reduction pass for sum & sumsq."""
        C = acc.shape[0]
        stats = jnp.sum(jnp.concatenate([acc, acc * acc], axis=0),
                        axis=1, keepdims=True) * inv_m       # [2C, 1]
        mean = stats[:C]
        var = jnp.maximum(stats[C:] - mean * mean, 0.0)      # clamp E[x^2]-E[x]^2
        scale = g * jax.lax.rsqrt(var + eps)                 # EUP rsqrt (free slot)
        return scale, b - mean * scale

    xT = xT_ref[...]                                         # [Cin_p, NM]

    # conv1 (3x3, pad 1, no bias): one MXU dot [Cout, 9*Cin_p] @ [9*Cin_p, NM].
    acc1 = jnp.dot(w1_ref[...], windows(xT), preferred_element_type=jnp.float32)
    s1, t1 = bn_scale_shift(acc1, g1_ref[...], b1_ref[...])
    h = jnp.maximum(acc1 * s1 + t1, 0.0)                     # BN1 + ReLU, lane-dense

    # conv2 (3x3, pad 1, no bias): one MXU dot [Cout, 9*Cout] @ [9*Cout, NM].
    acc2 = jnp.dot(w2_ref[...], windows(h), preferred_element_type=jnp.float32)
    s2, t2 = bn_scale_shift(acc2, g2_ref[...], b2_ref[...])

    # skip: 1x1 conv with bias, plus residual add; the store is unmasked / lane-dense.
    skip = jnp.dot(wsT_ref[...], xT, preferred_element_type=jnp.float32)
    out_ref[...] = acc2 * s2 + (t2 + bs_ref[...]) + skip


def residual_block_pallas(x_nchw, params):
    """x_nchw: (N, Cin, H, W) float32 -> (N, Cout, H, W) float32."""
    x = x_nchw.astype(jnp.float32)
    N, Cin, H, W = x.shape
    Cout = params["w1"].shape[-1]
    NM = N * H * W
    Cin_p = ((Cin + 7) // 8) * 8                     # pad input channels to a sublane multiple

    # Channel-major lane-dense activation [Cin_p, N*H*W] (padded channels are zero rows).
    xT = x.transpose(1, 0, 2, 3).reshape(Cin, NM)
    xT = jnp.pad(xT, ((0, Cin_p - Cin), (0, 0)))

    # Weights laid out so rows match the in-kernel tap-major / channel-minor window stacking.
    w1 = jnp.pad(params["w1"], ((0, 0), (0, 0), (0, Cin_p - Cin), (0, 0)))   # HWIO, Cin padded
    w1T = w1.reshape(9 * Cin_p, Cout).T                                      # [Cout, 9*Cin_p]
    w2T = params["w2"].reshape(9 * Cout, Cout).T                             # [Cout, 9*Cout]
    wsT = jnp.pad(params["ws"], ((0, Cin_p - Cin), (0, 0))).T                # [Cout, Cin_p]

    ccol = lambda v: v.reshape(Cout, 1)              # per-channel params as [Cout, 1] columns
    g1, b1 = ccol(params["g1"]), ccol(params["b1"])
    g2, b2 = ccol(params["g2"]), ccol(params["b2"])
    bs = ccol(params["bs"])

    vmem = pl.BlockSpec(memory_space=pltpu.MemorySpace.VMEM)
    outT = pl.pallas_call(
        functools.partial(_resblock_kernel, H=H, W=W),
        out_shape=jax.ShapeDtypeStruct((Cout, NM), jnp.float32),
        in_specs=[vmem] * 9,
        out_specs=vmem,
        compiler_params=pltpu.CompilerParams(vmem_limit_bytes=32 * 1024 * 1024),
    )(xT, w1T, g1, b1, w2T, g2, b2, wsT, bs)

    return outT.reshape(Cout, N, H, W).transpose(1, 0, 2, 3)   # back to NCHW


def residual_block_reference(x_nchw, params):
    """Pure-JAX reference mirroring the PyTorch forward (training-mode BN)."""
    eps = 1e-5
    x = jnp.transpose(x_nchw, (0, 2, 3, 1)).astype(jnp.float32)

    def conv3x3(h, w):
        return jax.lax.conv_general_dilated(
            h, w, (1, 1), "SAME",
            dimension_numbers=("NHWC", "HWIO", "NHWC"),
            precision=jax.lax.Precision.HIGHEST)

    def bn(h, g, b):
        m = jnp.mean(h, axis=(0, 1, 2), keepdims=True)
        v = jnp.mean((h - m) ** 2, axis=(0, 1, 2), keepdims=True)
        return (h - m) * jax.lax.rsqrt(v + eps) * g + b

    h = conv3x3(x, params["w1"])
    h = jnp.maximum(bn(h, params["g1"], params["b1"]), 0.0)
    h = conv3x3(h, params["w2"])
    h = bn(h, params["g2"], params["b2"])
    skip = jnp.einsum("nhwc,cd->nhwd", x, params["ws"],
                      precision=jax.lax.Precision.HIGHEST) + params["bs"]
    return jnp.transpose(skip + h, (0, 3, 1, 2))


def init_params(key, cin, cout):
    """Deterministic init matching the module's __init__ (He fan_out, BN gamma=1/beta=0)."""
    k1, k2, k3, k4 = jax.random.split(key, 4)
    std3 = float(np.sqrt(2.0 / (cout * 3 * 3)))   # kaiming_normal, mode='fan_out', relu
    std1 = float(np.sqrt(2.0 / (cout * 1 * 1)))
    bbound = float(1.0 / np.sqrt(cin))            # default Conv2d bias init range
    return {
        "w1": jax.random.normal(k1, (3, 3, cin, cout), jnp.float32) * std3,   # HWIO
        "w2": jax.random.normal(k2, (3, 3, cout, cout), jnp.float32) * std3,
        "g1": jnp.ones((1, cout), jnp.float32),
        "b1": jnp.zeros((1, cout), jnp.float32),
        "g2": jnp.ones((1, cout), jnp.float32),
        "b2": jnp.zeros((1, cout), jnp.float32),
        "ws": jax.random.normal(k3, (cin, cout), jnp.float32) * std1,         # 1x1 skip conv
        "bs": jax.random.uniform(k4, (1, cout), jnp.float32, -bbound, bbound),
    }


if __name__ == "__main__":
    key = jax.random.PRNGKey(0)
    kp, kx = jax.random.split(key)
    Cin, Cout = 4, 8
    N, H, W = 2, 16, 16

    params = init_params(kp, Cin, Cout)
    x = jax.random.normal(kx, (N, Cin, H, W), jnp.float32)

    out = jax.block_until_ready(residual_block_pallas(x, params))
    ref = jax.block_until_ready(residual_block_reference(x, params))

    assert out.shape == (N, Cout, H, W), out.shape
    np.testing.assert_allclose(np.asarray(out), np.asarray(ref), rtol=1e-2, atol=1e-2)
    print("KERNEL_OK")
</pallas_src>

<mosaic_0001>
module attributes {stable_mosaic.version = 11 : i64} {
  func.func @_resblock_kernel(%arg0: memref<8x512xf32, #tpu.memory_space<vmem>>, %arg1: memref<8x72xf32, #tpu.memory_space<vmem>>, %arg2: memref<8x1xf32, #tpu.memory_space<vmem>>, %arg3: memref<8x1xf32, #tpu.memory_space<vmem>>, %arg4: memref<8x72xf32, #tpu.memory_space<vmem>>, %arg5: memref<8x1xf32, #tpu.memory_space<vmem>>, %arg6: memref<8x1xf32, #tpu.memory_space<vmem>>, %arg7: memref<8x8xf32, #tpu.memory_space<vmem>>, %arg8: memref<8x1xf32, #tpu.memory_space<vmem>>, %arg9: memref<8x512xf32, #tpu.memory_space<vmem>>) attributes {dimension_semantics = [], scalar_prefetch = 0 : i64, scratch_operands = 0 : i64, tpu.core_type = #tpu.core_type<tc>} {
    %0 = tpu.iota {dimensions = array<i32: 1>} : vector<1x512xi32>
    %c15_i32 = arith.constant 15 : i32
    %1 = vector.broadcast %c15_i32 : i32 to vector<1x512xi32>
    %2 = arith.andi %0, %1 : vector<1x512xi32>
    %c4_i32 = arith.constant 4 : i32
    %3 = vector.broadcast %c4_i32 : i32 to vector<1x512xi32>
    %4 = arith.shrsi %0, %3 : vector<1x512xi32>
    %c15_i32_0 = arith.constant 15 : i32
    %5 = vector.broadcast %c15_i32_0 : i32 to vector<1x512xi32>
    %6 = arith.andi %4, %5 : vector<1x512xi32>
    %c-1_i32 = arith.constant -1 : i32
    %7 = vector.broadcast %c-1_i32 : i32 to vector<1x512xi32>
    %8 = arith.addi %6, %7 : vector<1x512xi32>
    %c0_i32 = arith.constant 0 : i32
    %9 = vector.broadcast %c0_i32 : i32 to vector<1x512xi32>
    %10 = arith.cmpi sge, %8, %9 : vector<1x512xi32>
    %c-1_i32_1 = arith.constant -1 : i32
    %11 = vector.broadcast %c-1_i32_1 : i32 to vector<1x512xi32>
    %12 = arith.addi %6, %11 : vector<1x512xi32>
    %c16_i32 = arith.constant 16 : i32
    %13 = vector.broadcast %c16_i32 : i32 to vector<1x512xi32>
    %14 = arith.cmpi slt, %12, %13 : vector<1x512xi32>
    %15 = arith.andi %10, %14 : vector<1x512xi1>
    %c-1_i32_2 = arith.constant -1 : i32
    %16 = vector.broadcast %c-1_i32_2 : i32 to vector<1x512xi32>
    %17 = arith.addi %2, %16 : vector<1x512xi32>
    %c0_i32_3 = arith.constant 0 : i32
    %18 = vector.broadcast %c0_i32_3 : i32 to vector<1x512xi32>
    %19 = arith.cmpi sge, %17, %18 : vector<1x512xi32>
    %20 = arith.andi %15, %19 : vector<1x512xi1>
    %c-1_i32_4 = arith.constant -1 : i32
    %21 = vector.broadcast %c-1_i32_4 : i32 to vector<1x512xi32>
    %22 = arith.addi %2, %21 : vector<1x512xi32>
    %c16_i32_5 = arith.constant 16 : i32
    %23 = vector.broadcast %c16_i32_5 : i32 to vector<1x512xi32>
    %24 = arith.cmpi slt, %22, %23 : vector<1x512xi32>
    %25 = arith.andi %20, %24 : vector<1x512xi1>
    %c-1_i32_6 = arith.constant -1 : i32
    %26 = vector.broadcast %c-1_i32_6 : i32 to vector<1x512xi32>
    %27 = arith.addi %6, %26 : vector<1x512xi32>
    %c0_i32_7 = arith.constant 0 : i32
    %28 = vector.broadcast %c0_i32_7 : i32 to vector<1x512xi32>
    %29 = arith.cmpi sge, %27, %28 : vector<1x512xi32>
    %c-1_i32_8 = arith.constant -1 : i32
    %30 = vector.broadcast %c-1_i32_8 : i32 to vector<1x512xi32>
    %31 = arith.addi %6, %30 : vector<1x512xi32>
    %c16_i32_9 = arith.constant 16 : i32
    %32 = vector.broadcast %c16_i32_9 : i32 to vector<1x512xi32>
    %33 = arith.cmpi slt, %31, %32 : vector<1x512xi32>
    %34 = arith.andi %29, %33 : vector<1x512xi1>
    %c0_i32_10 = arith.constant 0 : i32
    %35 = vector.broadcast %c0_i32_10 : i32 to vector<1x512xi32>
    %36 = arith.addi %2, %35 : vector<1x512xi32>
    %c0_i32_11 = arith.constant 0 : i32
    %37 = vector.broadcast %c0_i32_11 : i32 to vector<1x512xi32>
    %38 = arith.cmpi sge, %36, %37 : vector<1x512xi32>
    %39 = arith.andi %34, %38 : vector<1x512xi1>
    %c0_i32_12 = arith.constant 0 : i32
    %40 = vector.broadcast %c0_i32_12 : i32 to vector<1x512xi32>
    %41 = arith.addi %2, %40 : vector<1x512xi32>
    %c16_i32_13 = arith.constant 16 : i32
    %42 = vector.broadcast %c16_i32_13 : i32 to vector<1x512xi32>
    %43 = arith.cmpi slt, %41, %42 : vector<1x512xi32>
    %44 = arith.andi %39, %43 : vector<1x512xi1>
    %c-1_i32_14 = arith.constant -1 : i32
    %45 = vector.broadcast %c-1_i32_14 : i32 to vector<1x512xi32>
    %46 = arith.addi %6, %45 : vector<1x512xi32>
    %c0_i32_15 = arith.constant 0 : i32
    %47 = vector.broadcast %c0_i32_15 : i32 to vector<1x512xi32>
    %48 = arith.cmpi sge, %46, %47 : vector<1x512xi32>
    %c-1_i32_16 = arith.constant -1 : i32
    %49 = vector.broadcast %c-1_i32_16 : i32 to vector<1x512xi32>
    %50 = arith.addi %6, %49 : vector<1x512xi32>
    %c16_i32_17 = arith.constant 16 : i32
    %51 = vector.broadcast %c16_i32_17 : i32 to vector<1x512xi32>
    %52 = arith.cmpi slt, %50, %51 : vector<1x512xi32>
    %53 = arith.andi %48, %52 : vector<1x512xi1>
    %c1_i32 = arith.constant 1 : i32
    %54 = vector.broadcast %c1_i32 : i32 to vector<1x512xi32>
    %55 = arith.addi %2, %54 : vector<1x512xi32>
    %c0_i32_18 = arith.constant 0 : i32
    %56 = vector.broadcast %c0_i32_18 : i32 to vector<1x512xi32>
    %57 = arith.cmpi sge, %55, %56 : vector<1x512xi32>
    %58 = arith.andi %53, %57 : vector<1x512xi1>
    %c1_i32_19 = arith.constant 1 : i32
    %59 = vector.broadcast %c1_i32_19 : i32 to vector<1x512xi32>
    %60 = arith.addi %2, %59 : vector<1x512xi32>
    %c16_i32_20 = arith.constant 16 : i32
    %61 = vector.broadcast %c16_i32_20 : i32 to vector<1x512xi32>
    %62 = arith.cmpi slt, %60, %61 : vector<1x512xi32>
    %63 = arith.andi %58, %62 : vector<1x512xi1>
    %c0_i32_21 = arith.constant 0 : i32
    %64 = vector.broadcast %c0_i32_21 : i32 to vector<1x512xi32>
    %65 = arith.addi %6, %64 : vector<1x512xi32>
    %c0_i32_22 = arith.constant 0 : i32
    %66 = vector.broadcast %c0_i32_22 : i32 to vector<1x512xi32>
    %67 = arith.cmpi sge, %65, %66 : vector<1x512xi32>
    %c0_i32_23 = arith.constant 0 : i32
    %68 = vector.broadcast %c0_i32_23 : i32 to vector<1x512xi32>
    %69 = arith.addi %6, %68 : vector<1x512xi32>
    %c16_i32_24 = arith.constant 16 : i32
    %70 = vector.broadcast %c16_i32_24 : i32 to vector<1x512xi32>
    %71 = arith.cmpi slt, %69, %70 : vector<1x512xi32>
    %72 = arith.andi %67, %71 : vector<1x512xi1>
    %c-1_i32_25 = arith.constant -1 : i32
    %73 = vector.broadcast %c-1_i32_25 : i32 to vector<1x512xi32>
    %74 = arith.addi %2, %73 : vector<1x512xi32>
    %c0_i32_26 = arith.constant 0 : i32
    %75 = vector.broadcast %c0_i32_26 : i32 to vector<1x512xi32>
    %76 = arith.cmpi sge, %74, %75 : vector<1x512xi32>
    %77 = arith.andi %72, %76 : vector<1x512xi1>
    %c-1_i32_27 = arith.constant -1 : i32
    %78 = vector.broadcast %c-1_i32_27 : i32 to vector<1x512xi32>
    %79 = arith.addi %2, %78 : vector<1x512xi32>
    %c16_i32_28 = arith.constant 16 : i32
    %80 = vector.broadcast %c16_i32_28 : i32 to vector<1x512xi32>
    %81 = arith.cmpi slt, %79, %80 : vector<1x512xi32>
    %82 = arith.andi %77, %81 : vector<1x512xi1>
    %c0_i32_29 = arith.constant 0 : i32
    %83 = vector.broadcast %c0_i32_29 : i32 to vector<1x512xi32>
    %84 = arith.addi %6, %83 : vector<1x512xi32>
    %c0_i32_30 = arith.constant 0 : i32
    %85 = vector.broadcast %c0_i32_30 : i32 to vector<1x512xi32>
    %86 = arith.cmpi sge, %84, %85 : vector<1x512xi32>
    %c0_i32_31 = arith.constant 0 : i32
    %87 = vector.broadcast %c0_i32_31 : i32 to vector<1x512xi32>
    %88 = arith.addi %6, %87 : vector<1x512xi32>
    %c16_i32_32 = arith.constant 16 : i32
    %89 = vector.broadcast %c16_i32_32 : i32 to vector<1x512xi32>
    %90 = arith.cmpi slt, %88, %89 : vector<1x512xi32>
    %91 = arith.andi %86, %90 : vector<1x512xi1>
    %c1_i32_33 = arith.constant 1 : i32
    %92 = vector.broadcast %c1_i32_33 : i32 to vector<1x512xi32>
    %93 = arith.addi %2, %92 : vector<1x512xi32>
    %c0_i32_34 = arith.constant 0 : i32
    %94 = vector.broadcast %c0_i32_34 : i32 to vector<1x512xi32>
    %95 = arith.cmpi sge, %93, %94 : vector<1x512xi32>
    %96 = arith.andi %91, %95 : vector<1x512xi1>
    %c1_i32_35 = arith.constant 1 : i32
    %97 = vector.broadcast %c1_i32_35 : i32 to vector<1x512xi32>
    %98 = arith.addi %2, %97 : vector<1x512xi32>
    %c16_i32_36 = arith.constant 16 : i32
    %99 = vector.broadcast %c16_i32_36 : i32 to vector<1x512xi32>
    %100 = arith.cmpi slt, %98, %99 : vector<1x512xi32>
    %101 = arith.andi %96, %100 : vector<1x512xi1>
    %c1_i32_37 = arith.constant 1 : i32
    %102 = vector.broadcast %c1_i32_37 : i32 to vector<1x512xi32>
    %103 = arith.addi %6, %102 : vector<1x512xi32>
    %c0_i32_38 = arith.constant 0 : i32
    %104 = vector.broadcast %c0_i32_38 : i32 to vector<1x512xi32>
    %105 = arith.cmpi sge, %103, %104 : vector<1x512xi32>
    %c1_i32_39 = arith.constant 1 : i32
    %106 = vector.broadcast %c1_i32_39 : i32 to vector<1x512xi32>
    %107 = arith.addi %6, %106 : vector<1x512xi32>
    %c16_i32_40 = arith.constant 16 : i32
    %108 = vector.broadcast %c16_i32_40 : i32 to vector<1x512xi32>
    %109 = arith.cmpi slt, %107, %108 : vector<1x512xi32>
    %110 = arith.andi %105, %109 : vector<1x512xi1>
    %c-1_i32_41 = arith.constant -1 : i32
    %111 = vector.broadcast %c-1_i32_41 : i32 to vector<1x512xi32>
    %112 = arith.addi %2, %111 : vector<1x512xi32>
    %c0_i32_42 = arith.constant 0 : i32
    %113 = vector.broadcast %c0_i32_42 : i32 to vector<1x512xi32>
    %114 = arith.cmpi sge, %112, %113 : vector<1x512xi32>
    %115 = arith.andi %110, %114 : vector<1x512xi1>
    %c-1_i32_43 = arith.constant -1 : i32
    %116 = vector.broadcast %c-1_i32_43 : i32 to vector<1x512xi32>
    %117 = arith.addi %2, %116 : vector<1x512xi32>
    %c16_i32_44 = arith.constant 16 : i32
    %118 = vector.broadcast %c16_i32_44 : i32 to vector<1x512xi32>
    %119 = arith.cmpi slt, %117, %118 : vector<1x512xi32>
    %120 = arith.andi %115, %119 : vector<1x512xi1>
    %c1_i32_45 = arith.constant 1 : i32
    %121 = vector.broadcast %c1_i32_45 : i32 to vector<1x512xi32>
    %122 = arith.addi %6, %121 : vector<1x512xi32>
    %c0_i32_46 = arith.constant 0 : i32
    %123 = vector.broadcast %c0_i32_46 : i32 to vector<1x512xi32>
    %124 = arith.cmpi sge, %122, %123 : vector<1x512xi32>
    %c1_i32_47 = arith.constant 1 : i32
    %125 = vector.broadcast %c1_i32_47 : i32 to vector<1x512xi32>
    %126 = arith.addi %6, %125 : vector<1x512xi32>
    %c16_i32_48 = arith.constant 16 : i32
    %127 = vector.broadcast %c16_i32_48 : i32 to vector<1x512xi32>
    %128 = arith.cmpi slt, %126, %127 : vector<1x512xi32>
    %129 = arith.andi %124, %128 : vector<1x512xi1>
    %c0_i32_49 = arith.constant 0 : i32
    %130 = vector.broadcast %c0_i32_49 : i32 to vector<1x512xi32>
    %131 = arith.addi %2, %130 : vector<1x512xi32>
    %c0_i32_50 = arith.constant 0 : i32
    %132 = vector.broadcast %c0_i32_50 : i32 to vector<1x512xi32>
    %133 = arith.cmpi sge, %131, %132 : vector<1x512xi32>
    %134 = arith.andi %129, %133 : vector<1x512xi1>
    %c0_i32_51 = arith.constant 0 : i32
    %135 = vector.broadcast %c0_i32_51 : i32 to vector<1x512xi32>
    %136 = arith.addi %2, %135 : vector<1x512xi32>
    %c16_i32_52 = arith.constant 16 : i32
    %137 = vector.broadcast %c16_i32_52 : i32 to vector<1x512xi32>
    %138 = arith.cmpi slt, %136, %137 : vector<1x512xi32>
    %139 = arith.andi %134, %138 : vector<1x512xi1>
    %c1_i32_53 = arith.constant 1 : i32
    %140 = vector.broadcast %c1_i32_53 : i32 to vector<1x512xi32>
    %141 = arith.addi %6, %140 : vector<1x512xi32>
    %c0_i32_54 = arith.constant 0 : i32
    %142 = vector.broadcast %c0_i32_54 : i32 to vector<1x512xi32>
    %143 = arith.cmpi sge, %141, %142 : vector<1x512xi32>
    %c1_i32_55 = arith.constant 1 : i32
    %144 = vector.broadcast %c1_i32_55 : i32 to vector<1x512xi32>
    %145 = arith.addi %6, %144 : vector<1x512xi32>
    %c16_i32_56 = arith.constant 16 : i32
    %146 = vector.broadcast %c16_i32_56 : i32 to vector<1x512xi32>
    %147 = arith.cmpi slt, %145, %146 : vector<1x512xi32>
    %148 = arith.andi %143, %147 : vector<1x512xi1>
    %c1_i32_57 = arith.constant 1 : i32
    %149 = vector.broadcast %c1_i32_57 : i32 to vector<1x512xi32>
    %150 = arith.addi %2, %149 : vector<1x512xi32>
    %c0_i32_58 = arith.constant 0 : i32
    %151 = vector.broadcast %c0_i32_58 : i32 to vector<1x512xi32>
    %152 = arith.cmpi sge, %150, %151 : vector<1x512xi32>
    %153 = arith.andi %148, %152 : vector<1x512xi1>
    %c1_i32_59 = arith.constant 1 : i32
    %154 = vector.broadcast %c1_i32_59 : i32 to vector<1x512xi32>
    %155 = arith.addi %2, %154 : vector<1x512xi32>
    %c16_i32_60 = arith.constant 16 : i32
    %156 = vector.broadcast %c16_i32_60 : i32 to vector<1x512xi32>
    %157 = arith.cmpi slt, %155, %156 : vector<1x512xi32>
    %158 = arith.andi %153, %157 : vector<1x512xi1>
    %c0 = arith.constant 0 : index
    %c0_61 = arith.constant 0 : index
    %159 = vector.load %arg0[%c0, %c0_61] : memref<8x512xf32, #tpu.memory_space<vmem>>, vector<8x512xf32>
    %c0_62 = arith.constant 0 : index
    %c0_63 = arith.constant 0 : index
    %160 = vector.load %arg1[%c0_62, %c0_63] : memref<8x72xf32, #tpu.memory_space<vmem>>, vector<8x72xf32>
    %c17_i32 = arith.constant 17 : i32
    %161 = tpu.dynamic_rotate %159 by %c17_i32 dim 1 : vector<8x512xf32>, i32 -> vector<8x512xf32>
    %cst = arith.constant 0.000000e+00 : f32
    %162 = vector.shape_cast %25 : vector<1x512xi1> to vector<1x512xi1>
    %163 = vector.broadcast %162 : vector<1x512xi1> to vector<8x512xi1>
    %164 = vector.broadcast %cst : f32 to vector<8x512xf32>
    %165 = arith.select %163, %161, %164 : vector<8x512xi1>, vector<8x512xf32>
    %c16_i32_64 = arith.constant 16 : i32
    %166 = tpu.dynamic_rotate %159 by %c16_i32_64 dim 1 : vector<8x512xf32>, i32 -> vector<8x512xf32>
    %cst_65 = arith.constant 0.000000e+00 : f32
    %167 = vector.shape_cast %44 : vector<1x512xi1> to vector<1x512xi1>
    %168 = vector.broadcast %167 : vector<1x512xi1> to vector<8x512xi1>
    %169 = vector.broadcast %cst_65 : f32 to vector<8x512xf32>
    %170 = arith.select %168, %166, %169 : vector<8x512xi1>, vector<8x512xf32>
    %c15_i32_66 = arith.constant 15 : i32
    %171 = tpu.dynamic_rotate %159 by %c15_i32_66 dim 1 : vector<8x512xf32>, i32 -> vector<8x512xf32>
    %cst_67 = arith.constant 0.000000e+00 : f32
    %172 = vector.shape_cast %63 : vector<1x512xi1> to vector<1x512xi1>
    %173 = vector.broadcast %172 : vector<1x512xi1> to vector<8x512xi1>
    %174 = vector.broadcast %cst_67 : f32 to vector<8x512xf32>
    %175 = arith.select %173, %171, %174 : vector<8x512xi1>, vector<8x512xf32>
    %c1_i32_68 = arith.constant 1 : i32
    %176 = tpu.dynamic_rotate %159 by %c1_i32_68 dim 1 : vector<8x512xf32>, i32 -> vector<8x512xf32>
    %cst_69 = arith.constant 0.000000e+00 : f32
    %177 = vector.shape_cast %82 : vector<1x512xi1> to vector<1x512xi1>
    %178 = vector.broadcast %177 : vector<1x512xi1> to vector<8x512xi1>
    %179 = vector.broadcast %cst_69 : f32 to vector<8x512xf32>
    %180 = arith.select %178, %176, %179 : vector<8x512xi1>, vector<8x512xf32>
    %c511_i32 = arith.constant 511 : i32
    %181 = tpu.dynamic_rotate %159 by %c511_i32 dim 1 : vector<8x512xf32>, i32 -> vector<8x512xf32>
    %cst_70 = arith.constant 0.000000e+00 : f32
    %182 = vector.shape_cast %101 : vector<1x512xi1> to vector<1x512xi1>
    %183 = vector.broadcast %182 : vector<1x512xi1> to vector<8x512xi1>
    %184 = vector.broadcast %cst_70 : f32 to vector<8x512xf32>
    %185 = arith.select %183, %181, %184 : vector<8x512xi1>, vector<8x512xf32>
    %c497_i32 = arith.constant 497 : i32
    %186 = tpu.dynamic_rotate %159 by %c497_i32 dim 1 : vector<8x512xf32>, i32 -> vector<8x512xf32>
    %cst_71 = arith.constant 0.000000e+00 : f32
    %187 = vector.shape_cast %120 : vector<1x512xi1> to vector<1x512xi1>
    %188 = vector.broadcast %187 : vector<1x512xi1> to vector<8x512xi1>
    %189 = vector.broadcast %cst_71 : f32 to vector<8x512xf32>
    %190 = arith.select %188, %186, %189 : vector<8x512xi1>, vector<8x512xf32>
    %c496_i32 = arith.constant 496 : i32
    %191 = tpu.dynamic_rotate %159 by %c496_i32 dim 1 : vector<8x512xf32>, i32 -> vector<8x512xf32>
    %cst_72 = arith.constant 0.000000e+00 : f32
    %192 = vector.shape_cast %139 : vector<1x512xi1> to vector<1x512xi1>
    %193 = vector.broadcast %192 : vector<1x512xi1> to vector<8x512xi1>
    %194 = vector.broadcast %cst_72 : f32 to vector<8x512xf32>
    %195 = arith.select %193, %191, %194 : vector<8x512xi1>, vector<8x512xf32>
    %c495_i32 = arith.constant 495 : i32
    %196 = tpu.dynamic_rotate %159 by %c495_i32 dim 1 : vector<8x512xf32>, i32 -> vector<8x512xf32>
    %cst_73 = arith.constant 0.000000e+00 : f32
    %197 = vector.shape_cast %158 : vector<1x512xi1> to vector<1x512xi1>
    %198 = vector.broadcast %197 : vector<1x512xi1> to vector<8x512xi1>
    %199 = vector.broadcast %cst_73 : f32 to vector<8x512xf32>
    %200 = arith.select %198, %196, %199 : vector<8x512xi1>, vector<8x512xf32>
    %201 = tpu.concatenate %165, %170, %175, %180, %159, %185, %190, %195, %200 in 0 : vector<8x512xf32>, vector<8x512xf32>, vector<8x512xf32>, vector<8x512xf32>, vector<8x512xf32>, vector<8x512xf32>, vector<8x512xf32>, vector<8x512xf32>, vector<8x512xf32> -> vector<72x512xf32>
    %cst_74 = arith.constant dense<0.000000e+00> : vector<8x512xf32>
    %202 = tpu.matmul %160, %201, %cst_74 {dimension_numbers = #tpu.dot_dimension_numbers<[1], [0], [0], [1], [0, 0, 1, 1], [], []>} : vector<8x72xf32>, vector<72x512xf32>, vector<8x512xf32> -> vector<8x512xf32>
    %c0_75 = arith.constant 0 : index
    %c0_76 = arith.constant 0 : index
    %203 = vector.load %arg2[%c0_75, %c0_76] : memref<8x1xf32, #tpu.memory_space<vmem>>, vector<8x1xf32>
    %c0_77 = arith.constant 0 : index
    %c0_78 = arith.constant 0 : index
    %204 = vector.load %arg3[%c0_77, %c0_78] : memref<8x1xf32, #tpu.memory_space<vmem>>, vector<8x1xf32>
    %205 = arith.mulf %202, %202 : vector<8x512xf32>
    %206 = tpu.concatenate %202, %205 in 0 : vector<8x512xf32>, vector<8x512xf32> -> vector<16x512xf32>
    %cst_79 = arith.constant dense<0.000000e+00> : vector<16xf32>
    %207 = vector.multi_reduction <add>, %206, %cst_79 [1] : vector<16x512xf32> to vector<16xf32>
    %208 = vector.shape_cast %207 : vector<16xf32> to vector<16x1xf32>
    %cst_80 = arith.constant 0.001953125 : f32
    %209 = vector.broadcast %cst_80 : f32 to vector<16x1xf32>
    %210 = arith.mulf %208, %209 : vector<16x1xf32>
    %211 = vector.extract_strided_slice %210 {offsets = [0, 0], sizes = [8, 1], strides = [1, 1]} : vector<16x1xf32> to vector<8x1xf32>
    %212 = vector.extract_strided_slice %210 {offsets = [8, 0], sizes = [8, 1], strides = [1, 1]} : vector<16x1xf32> to vector<8x1xf32>
    %213 = arith.mulf %211, %211 : vector<8x1xf32>
    %214 = arith.subf %212, %213 : vector<8x1xf32>
    %cst_81 = arith.constant 0.000000e+00 : f32
    %215 = vector.broadcast %cst_81 : f32 to vector<8x1xf32>
    %216 = arith.maximumf %214, %215 : vector<8x1xf32>
    %cst_82 = arith.constant 9.99999974E-6 : f32
    %217 = vector.broadcast %cst_82 : f32 to vector<8x1xf32>
    %218 = arith.addf %216, %217 : vector<8x1xf32>
    %219 = math.rsqrt %218 : vector<8x1xf32>
    %220 = arith.mulf %203, %219 : vector<8x1xf32>
    %221 = arith.mulf %211, %220 : vector<8x1xf32>
    %222 = arith.subf %204, %221 : vector<8x1xf32>
    %223 = vector.broadcast %220 : vector<8x1xf32> to vector<8x512xf32>
    %224 = arith.mulf %202, %223 : vector<8x512xf32>
    %225 = vector.broadcast %222 : vector<8x1xf32> to vector<8x512xf32>
    %226 = arith.addf %224, %225 : vector<8x512xf32>
    %cst_83 = arith.constant 0.000000e+00 : f32
    %227 = vector.broadcast %cst_83 : f32 to vector<8x512xf32>
    %228 = arith.maximumf %226, %227 : vector<8x512xf32>
    %c0_84 = arith.constant 0 : index
    %c0_85 = arith.constant 0 : index
    %229 = vector.load %arg4[%c0_84, %c0_85] : memref<8x72xf32, #tpu.memory_space<vmem>>, vector<8x72xf32>
    %c17_i32_86 = arith.constant 17 : i32
    %230 = tpu.dynamic_rotate %228 by %c17_i32_86 dim 1 : vector<8x512xf32>, i32 -> vector<8x512xf32>
    %cst_87 = arith.constant 0.000000e+00 : f32
    %231 = vector.shape_cast %25 : vector<1x512xi1> to vector<1x512xi1>
    %232 = vector.broadcast %231 : vector<1x512xi1> to vector<8x512xi1>
    %233 = vector.broadcast %cst_87 : f32 to vector<8x512xf32>
    %234 = arith.select %232, %230, %233 : vector<8x512xi1>, vector<8x512xf32>
    %c16_i32_88 = arith.constant 16 : i32
    %235 = tpu.dynamic_rotate %228 by %c16_i32_88 dim 1 : vector<8x512xf32>, i32 -> vector<8x512xf32>
    %cst_89 = arith.constant 0.000000e+00 : f32
    %236 = vector.shape_cast %44 : vector<1x512xi1> to vector<1x512xi1>
    %237 = vector.broadcast %236 : vector<1x512xi1> to vector<8x512xi1>
    %238 = vector.broadcast %cst_89 : f32 to vector<8x512xf32>
    %239 = arith.select %237, %235, %238 : vector<8x512xi1>, vector<8x512xf32>
    %c15_i32_90 = arith.constant 15 : i32
    %240 = tpu.dynamic_rotate %228 by %c15_i32_90 dim 1 : vector<8x512xf32>, i32 -> vector<8x512xf32>
    %cst_91 = arith.constant 0.000000e+00 : f32
    %241 = vector.shape_cast %63 : vector<1x512xi1> to vector<1x512xi1>
    %242 = vector.broadcast %241 : vector<1x512xi1> to vector<8x512xi1>
    %243 = vector.broadcast %cst_91 : f32 to vector<8x512xf32>
    %244 = arith.select %242, %240, %243 : vector<8x512xi1>, vector<8x512xf32>
    %c1_i32_92 = arith.constant 1 : i32
    %245 = tpu.dynamic_rotate %228 by %c1_i32_92 dim 1 : vector<8x512xf32>, i32 -> vector<8x512xf32>
    %cst_93 = arith.constant 0.000000e+00 : f32
    %246 = vector.shape_cast %82 : vector<1x512xi1> to vector<1x512xi1>
    %247 = vector.broadcast %246 : vector<1x512xi1> to vector<8x512xi1>
    %248 = vector.broadcast %cst_93 : f32 to vector<8x512xf32>
    %249 = arith.select %247, %245, %248 : vector<8x512xi1>, vector<8x512xf32>
    %c511_i32_94 = arith.constant 511 : i32
    %250 = tpu.dynamic_rotate %228 by %c511_i32_94 dim 1 : vector<8x512xf32>, i32 -> vector<8x512xf32>
    %cst_95 = arith.constant 0.000000e+00 : f32
    %251 = vector.shape_cast %101 : vector<1x512xi1> to vector<1x512xi1>
    %252 = vector.broadcast %251 : vector<1x512xi1> to vector<8x512xi1>
    %253 = vector.broadcast %cst_95 : f32 to vector<8x512xf32>
    %254 = arith.select %252, %250, %253 : vector<8x512xi1>, vector<8x512xf32>
    %c497_i32_96 = arith.constant 497 : i32
    %255 = tpu.dynamic_rotate %228 by %c497_i32_96 dim 1 : vector<8x512xf32>, i32 -> vector<8x512xf32>
    %cst_97 = arith.constant 0.000000e+00 : f32
    %256 = vector.shape_cast %120 : vector<1x512xi1> to vector<1x512xi1>
    %257 = vector.broadcast %256 : vector<1x512xi1> to vector<8x512xi1>
    %258 = vector.broadcast %cst_97 : f32 to vector<8x512xf32>
    %259 = arith.select %257, %255, %258 : vector<8x512xi1>, vector<8x512xf32>
    %c496_i32_98 = arith.constant 496 : i32
    %260 = tpu.dynamic_rotate %228 by %c496_i32_98 dim 1 : vector<8x512xf32>, i32 -> vector<8x512xf32>
    %cst_99 = arith.constant 0.000000e+00 : f32
    %261 = vector.shape_cast %139 : vector<1x512xi1> to vector<1x512xi1>
    %262 = vector.broadcast %261 : vector<1x512xi1> to vector<8x512xi1>
    %263 = vector.broadcast %cst_99 : f32 to vector<8x512xf32>
    %264 = arith.select %262, %260, %263 : vector<8x512xi1>, vector<8x512xf32>
    %c495_i32_100 = arith.constant 495 : i32
    %265 = tpu.dynamic_rotate %228 by %c495_i32_100 dim 1 : vector<8x512xf32>, i32 -> vector<8x512xf32>
    %cst_101 = arith.constant 0.000000e+00 : f32
    %266 = vector.shape_cast %158 : vector<1x512xi1> to vector<1x512xi1>
    %267 = vector.broadcast %266 : vector<1x512xi1> to vector<8x512xi1>
    %268 = vector.broadcast %cst_101 : f32 to vector<8x512xf32>
    %269 = arith.select %267, %265, %268 : vector<8x512xi1>, vector<8x512xf32>
    %270 = tpu.concatenate %234, %239, %244, %249, %228, %254, %259, %264, %269 in 0 : vector<8x512xf32>, vector<8x512xf32>, vector<8x512xf32>, vector<8x512xf32>, vector<8x512xf32>, vector<8x512xf32>, vector<8x512xf32>, vector<8x512xf32>, vector<8x512xf32> -> vector<72x512xf32>
    %cst_102 = arith.constant dense<0.000000e+00> : vector<8x512xf32>
    %271 = tpu.matmul %229, %270, %cst_102 {dimension_numbers = #tpu.dot_dimension_numbers<[1], [0], [0], [1], [0, 0, 1, 1], [], []>} : vector<8x72xf32>, vector<72x512xf32>, vector<8x512xf32> -> vector<8x512xf32>
    %c0_103 = arith.constant 0 : index
    %c0_104 = arith.constant 0 : index
    %272 = vector.load %arg5[%c0_103, %c0_104] : memref<8x1xf32, #tpu.memory_space<vmem>>, vector<8x1xf32>
    %c0_105 = arith.constant 0 : index
    %c0_106 = arith.constant 0 : index
    %273 = vector.load %arg6[%c0_105, %c0_106] : memref<8x1xf32, #tpu.memory_space<vmem>>, vector<8x1xf32>
    %274 = arith.mulf %271, %271 : vector<8x512xf32>
    %275 = tpu.concatenate %271, %274 in 0 : vector<8x512xf32>, vector<8x512xf32> -> vector<16x512xf32>
    %cst_107 = arith.constant dense<0.000000e+00> : vector<16xf32>
    %276 = vector.multi_reduction <add>, %275, %cst_107 [1] : vector<16x512xf32> to vector<16xf32>
    %277 = vector.shape_cast %276 : vector<16xf32> to vector<16x1xf32>
    %cst_108 = arith.constant 0.001953125 : f32
    %278 = vector.broadcast %cst_108 : f32 to vector<16x1xf32>
    %279 = arith.mulf %277, %278 : vector<16x1xf32>
    %280 = vector.extract_strided_slice %279 {offsets = [0, 0], sizes = [8, 1], strides = [1, 1]} : vector<16x1xf32> to vector<8x1xf32>
    %281 = vector.extract_strided_slice %279 {offsets = [8, 0], sizes = [8, 1], strides = [1, 1]} : vector<16x1xf32> to vector<8x1xf32>
    %282 = arith.mulf %280, %280 : vector<8x1xf32>
    %283 = arith.subf %281, %282 : vector<8x1xf32>
    %cst_109 = arith.constant 0.000000e+00 : f32
    %284 = vector.broadcast %cst_109 : f32 to vector<8x1xf32>
    %285 = arith.maximumf %283, %284 : vector<8x1xf32>
    %cst_110 = arith.constant 9.99999974E-6 : f32
    %286 = vector.broadcast %cst_110 : f32 to vector<8x1xf32>
    %287 = arith.addf %285, %286 : vector<8x1xf32>
    %288 = math.rsqrt %287 : vector<8x1xf32>
    %289 = arith.mulf %272, %288 : vector<8x1xf32>
    %290 = arith.mulf %280, %289 : vector<8x1xf32>
    %291 = arith.subf %273, %290 : vector<8x1xf32>
    %c0_111 = arith.constant 0 : index
    %c0_112 = arith.constant 0 : index
    %292 = vector.load %arg7[%c0_111, %c0_112] : memref<8x8xf32, #tpu.memory_space<vmem>>, vector<8x8xf32>
    %cst_113 = arith.constant dense<0.000000e+00> : vector<8x512xf32>
    %293 = tpu.matmul %292, %159, %cst_113 {dimension_numbers = #tpu.dot_dimension_numbers<[1], [0], [0], [1], [0, 0, 1, 1], [], []>} : vector<8x8xf32>, vector<8x512xf32>, vector<8x512xf32> -> vector<8x512xf32>
    %294 = vector.broadcast %289 : vector<8x1xf32> to vector<8x512xf32>
    %295 = arith.mulf %271, %294 : vector<8x512xf32>
    %c0_114 = arith.constant 0 : index
    %c0_115 = arith.constant 0 : index
    %296 = vector.load %arg8[%c0_114, %c0_115] : memref<8x1xf32, #tpu.memory_space<vmem>>, vector<8x1xf32>
    %297 = arith.addf %291, %296 : vector<8x1xf32>
    %298 = vector.broadcast %297 : vector<8x1xf32> to vector<8x512xf32>
    %299 = arith.addf %295, %298 : vector<8x512xf32>
    %300 = arith.addf %299, %293 : vector<8x512xf32>
    %c0_116 = arith.constant 0 : index
    %c0_117 = arith.constant 0 : index
    %301 = vector.load %arg9[%c0_116, %c0_117] : memref<8x512xf32, #tpu.memory_space<vmem>>, vector<8x512xf32>
    tpu.vector_store %arg9[%c0_116, %c0_117], %300 {strides = array<i32>} : memref<8x512xf32, #tpu.memory_space<vmem>>, vector<8x512xf32>,
    return
  }
}

</mosaic_0001>

<llo_original>
// kernel: tpu_custom_call.1
$region0: #{tpu_custom_call.1}
  #allocation0 [shape = 'u32[]', space=smem, size = 0x4, offset = 0x4, fixed_abs, tag = 'smem constant byte address 0x4 - core index']
  #allocation1 [shape = 'u32[72,128]{1,0:T(1,128)}', space=vmem, size = 0x9000, scoped, tag = 'internal scratch']
  %s0 = inlined_call_operand.hbm [shape: f32[8,512], index: 0, kind: input, shape index: {}]
  %s1 = inlined_call_operand.vmem [shape: f32[8,72], index: 1, kind: input, shape index: {}]
  %s2 = inlined_call_operand.vmem [shape: f32[8,1], index: 2, kind: input, shape index: {}]
  %s3 = inlined_call_operand.vmem [shape: f32[8,1], index: 3, kind: input, shape index: {}]
  %s4 = inlined_call_operand.vmem [shape: f32[8,72], index: 4, kind: input, shape index: {}]
  %s5 = inlined_call_operand.vmem [shape: f32[8,1], index: 5, kind: input, shape index: {}]
  %s6 = inlined_call_operand.vmem [shape: f32[8,1], index: 6, kind: input, shape index: {}]
  %s7 = inlined_call_operand.vmem [shape: f32[8,8], index: 7, kind: input, shape index: {}]
  %s8 = inlined_call_operand.vmem [shape: f32[8,1], index: 8, kind: input, shape index: {}]
  %s9 = inlined_call_operand.hbm [shape: f32[8,512], index: 9, kind: output, shape index: {}]
  %s10 = sld [smem:[#allocation0]]
  $region50: #{tpu_custom_call.1} parent=0
    _
  %s12 = ssub.s32 1, %s10
  %s13 = scalar_select 0, %s12, %s10
  $region1: #{tpu_custom_call.1} parent=0
    #allocation2 [shape = 'u8[16384]{0}', space=vmem, size = 0x4000, scoped, tag = 'input window, operand 0, single buffered']
    #allocation3 [shape = 's32[1]{0}', space=sflag, size = 0x4, scoped, tag = 'scoped memory for tpu_custom_call.1']
    #allocation4 [shape = 's32[1]{0}', space=sflag, size = 0x4, scoped, tag = 'scoped memory for tpu_custom_call.1']
    #allocation5 [shape = 'u8[16384]{0}', space=vmem, size = 0x4000, scoped, tag = 'output window, operand 0, single buffered']
    %14 = vsyncpa [#allocation3], 0
    %15 = vsyncpa [#allocation4], 0
    // Predicated region
    $region2: #{tpu_custom_call.1} parent=1 // pred_check
      _
    $region3: #{tpu_custom_call.1} parent=1 // pred_check_branch
      %17 = sbr.rel (0) target = $region5
    $region4: #{tpu_custom_call.1} parent=1 // pred_region
      %19 = vsyncadd [#allocation3], 0
      %s21 = sshll.u32 %s0, 4
      %s22 = int_to_ptr.hbm [resolvable:$true] %s21
      %s23 = sshll.u32 [#allocation2], 4
      %s24 = int_to_ptr.vmem [resolvable:$true] %s23
      %26 = dma.hbm_to_vmem [thread:$0]  %s22, 512, %s24, [#allocation3]
    $region5: #{tpu_custom_call.1} parent=1 // pred_fallthru
      _
    // Predicated region
    $region6: #{tpu_custom_call.1} parent=1 // pred_check
      _
    $region7: #{tpu_custom_call.1} parent=1 // pred_check_branch
      %28 = sbr.rel (0) target = $region9
    $region8: #{tpu_custom_call.1} parent=1 // pred_region
      _
    $region9: #{tpu_custom_call.1} parent=1 // pred_fallthru
      _
    // Predicated region
    $region10: #{tpu_custom_call.1} parent=1 // pred_check
      _
    $region11: #{tpu_custom_call.1} parent=1 // pred_check_branch
      %30 = sbr.rel (0) target = $region13
    $region12: #{tpu_custom_call.1} parent=1 // pred_region
      _
    $region13: #{tpu_custom_call.1} parent=1 // pred_fallthru
      _
    // Predicated region
    $region14: #{tpu_custom_call.1} parent=1 // pred_check
      _
    $region15: #{tpu_custom_call.1} parent=1 // pred_check_branch
      %32 = sbr.rel (0) target = $region17
    $region16: #{tpu_custom_call.1} parent=1 // pred_region
      _
    $region17: #{tpu_custom_call.1} parent=1 // pred_fallthru
      _
    // Predicated region
    $region18: #{tpu_custom_call.1} parent=1 // pred_check
      _
    $region19: #{tpu_custom_call.1} parent=1 // pred_check_branch
      %34 = sbr.rel (0) target = $region21
    $region20: #{tpu_custom_call.1} parent=1 // pred_region
      _
    $region21: #{tpu_custom_call.1} parent=1 // pred_fallthru
      _
    // Predicated region
    $region22: #{tpu_custom_call.1} parent=1 // pred_check
      _
    $region23: #{tpu_custom_call.1} parent=1 // pred_check_branch
      %36 = sbr.rel (0) target = $region25
    $region24: #{tpu_custom_call.1} parent=1 // pred_region
      _
    $region25: #{tpu_custom_call.1} parent=1 // pred_fallthru
      _
    // Predicated region
    $region26: #{tpu_custom_call.1} parent=1 // pred_check
      _
    $region27: #{tpu_custom_call.1} parent=1 // pred_check_branch
      %38 = sbr.rel (0) target = $region29
    $region28: #{tpu_custom_call.1} parent=1 // pred_region
      _
    $region29: #{tpu_custom_call.1} parent=1 // pred_fallthru
      _
    // Predicated region
    $region30: #{tpu_custom_call.1} parent=1 // pred_check
      _
    $region31: #{tpu_custom_call.1} parent=1 // pred_check_branch
      %40 = sbr.rel (0) target = $region33
    $region32: #{tpu_custom_call.1} parent=1 // pred_region
      _
    $region33: #{tpu_custom_call.1} parent=1 // pred_fallthru
      _
    // Predicated region
    $region34: #{tpu_custom_call.1} parent=1 // pred_check
      _
    $region35: #{tpu_custom_call.1} parent=1 // pred_check_branch
      %42 = sbr.rel (0) target = $region37
    $region36: #{tpu_custom_call.1} parent=1 // pred_region
      _
    $region37: #{tpu_custom_call.1} parent=1 // pred_fallthru
      _
    // Predicated region
    $region38: #{tpu_custom_call.1} parent=1 // pred_check
      _
    $region39: #{tpu_custom_call.1} parent=1 // pred_check_branch
      %44 = sbr.rel (0) target = $region41
    $region40: #{tpu_custom_call.1} parent=1 // pred_region
      %46 = dma.done [#allocation3], 512
    $region41: #{tpu_custom_call.1} parent=1 // pred_fallthru
      _
    %v47 = vlaneseq
    %v48 = vand.u32 %v47, 127
    %v49 = vadd.s32 %v48, 128
    %v50 = vadd.s32 %v48, 256
    %v51 = vadd.s32 %v48, 384
    %v52 = vand.u32 %v48, 15
    %v53 = vand.u32 %v49, 15
    %v54 = vand.u32 %v50, 15
    %v55 = vand.u32 %v51, 15
    %v56 = vshra.s32 %v48, 4
    %v57 = vshra.s32 %v49, 4
    %v58 = vshra.s32 %v50, 4
    %v59 = vshra.s32 %v51, 4
    %v60 = vand.u32 %v56, 15
    %v61 = vand.u32 %v57, 15
    %v62 = vand.u32 %v58, 15
    %v63 = vand.u32 %v59, 15
    %v64 = vadd.s32 %v60, 4294967295
    %v65 = vadd.s32 %v61, 4294967295
    %v66 = vadd.s32 %v62, 4294967295
    %v67 = vadd.s32 %v63, 4294967295
    %vm68 = vcmp.ge.s32.totalorder %v64, 0
    %vm69 = vcmp.ge.s32.totalorder %v65, 0
    %vm70 = vcmp.ge.s32.totalorder %v66, 0
    %vm71 = vcmp.ge.s32.totalorder %v67, 0
    %vm72 = vcmp.lt.s32.totalorder %v64, 16
    %vm73 = vcmp.lt.s32.totalorder %v65, 16
    %vm74 = vcmp.lt.s32.totalorder %v66, 16
    %vm75 = vcmp.lt.s32.totalorder %v67, 16
    %vm76 = vmand %vm68, %vm72
    %vm77 = vmand %vm69, %vm73
    %vm78 = vmand %vm70, %vm74
    %vm79 = vmand %vm71, %vm75
    %v80 = vadd.s32 %v52, 4294967295
    %v81 = vadd.s32 %v53, 4294967295
    %v82 = vadd.s32 %v54, 4294967295
    %v83 = vadd.s32 %v55, 4294967295
    %vm84 = vcmp.ge.s32.totalorder %v80, 0
    %vm85 = vcmp.ge.s32.totalorder %v81, 0
    %vm86 = vcmp.ge.s32.totalorder %v82, 0
    %vm87 = vcmp.ge.s32.totalorder %v83, 0
    %vm88 = vmand %vm76, %vm84
    %vm89 = vmand %vm77, %vm85
    %vm90 = vmand %vm78, %vm86
    %vm91 = vmand %vm79, %vm87
    %vm92 = vcmp.lt.s32.totalorder %v80, 16
    %vm93 = vcmp.lt.s32.totalorder %v81, 16
    %vm94 = vcmp.lt.s32.totalorder %v82, 16
    %vm95 = vcmp.lt.s32.totalorder %v83, 16
    %vm96 = vmand %vm88, %vm92
    %vm97 = vmand %vm89, %vm93
    %vm98 = vmand %vm90, %vm94
    %vm99 = vmand %vm91, %vm95
    %vm100 = vcmp.ge.s32.totalorder %v52, 0
    %vm101 = vcmp.ge.s32.totalorder %v53, 0
    %vm102 = vcmp.ge.s32.totalorder %v54, 0
    %vm103 = vcmp.ge.s32.totalorder %v55, 0
    %vm104 = vmand %vm76, %vm100
    %vm105 = vmand %vm77, %vm101
    %vm106 = vmand %vm78, %vm102
    %vm107 = vmand %vm79, %vm103
    %vm108 = vcmp.lt.s32.totalorder %v52, 16
    %vm109 = vcmp.lt.s32.totalorder %v53, 16
    %vm110 = vcmp.lt.s32.totalorder %v54, 16
    %vm111 = vcmp.lt.s32.totalorder %v55, 16
    %vm112 = vmand %vm104, %vm108
    %vm113 = vmand %vm105, %vm109
    %vm114 = vmand %vm106, %vm110
    %vm115 = vmand %vm107, %vm111
    %v116 = vadd.s32 %v52, 1
    %v117 = vadd.s32 %v53, 1
    %v118 = vadd.s32 %v54, 1
    %v119 = vadd.s32 %v55, 1
    %vm120 = vcmp.ge.s32.totalorder %v116, 0
    %vm121 = vcmp.ge.s32.totalorder %v117, 0
    %vm122 = vcmp.ge.s32.totalorder %v118, 0
    %vm123 = vcmp.ge.s32.totalorder %v119, 0
    %vm124 = vmand %vm76, %vm120
    %vm125 = vmand %vm77, %vm121
    %vm126 = vmand %vm78, %vm122
    %vm127 = vmand %vm79, %vm123
    %vm128 = vcmp.lt.s32.totalorder %v116, 16
    %vm129 = vcmp.lt.s32.totalorder %v117, 16
    %vm130 = vcmp.lt.s32.totalorder %v118, 16
    %vm131 = vcmp.lt.s32.totalorder %v119, 16
    %vm132 = vmand %vm124, %vm128
    %vm133 = vmand %vm125, %vm129
    %vm134 = vmand %vm126, %vm130
    %vm135 = vmand %vm127, %vm131
    %vm136 = vcmp.ge.s32.totalorder %v60, 0
    %vm137 = vcmp.ge.s32.totalorder %v61, 0
    %vm138 = vcmp.ge.s32.totalorder %v62, 0
    %vm139 = vcmp.ge.s32.totalorder %v63, 0
    %vm140 = vcmp.lt.s32.totalorder %v60, 16
    %vm141 = vcmp.lt.s32.totalorder %v61, 16
    %vm142 = vcmp.lt.s32.totalorder %v62, 16
    %vm143 = vcmp.lt.s32.totalorder %v63, 16
    %vm144 = vmand %vm136, %vm140
    %vm145 = vmand %vm137, %vm141
    %vm146 = vmand %vm138, %vm142
    %vm147 = vmand %vm139, %vm143
    %vm148 = vmand %vm144, %vm84
    %vm149 = vmand %vm145, %vm85
    %vm150 = vmand %vm146, %vm86
    %vm151 = vmand %vm147, %vm87
    %vm152 = vmand %vm148, %vm92
    %vm153 = vmand %vm149, %vm93
    %vm154 = vmand %vm150, %vm94
    %vm155 = vmand %vm151, %vm95
    %vm156 = vmand %vm144, %vm120
    %vm157 = vmand %vm145, %vm121
    %vm158 = vmand %vm146, %vm122
    %vm159 = vmand %vm147, %vm123
    %vm160 = vmand %vm156, %vm128
    %vm161 = vmand %vm157, %vm129
    %vm162 = vmand %vm158, %vm130
    %vm163 = vmand %vm159, %vm131
    %v164 = vadd.s32 %v60, 1
    %v165 = vadd.s32 %v61, 1
    %v166 = vadd.s32 %v62, 1
    %v167 = vadd.s32 %v63, 1
    %vm168 = vcmp.ge.s32.totalorder %v164, 0
    %vm169 = vcmp.ge.s32.totalorder %v165, 0
    %vm170 = vcmp.ge.s32.totalorder %v166, 0
    %vm171 = vcmp.ge.s32.totalorder %v167, 0
    %vm172 = vcmp.lt.s32.totalorder %v164, 16
    %vm173 = vcmp.lt.s32.totalorder %v165, 16
    %vm174 = vcmp.lt.s32.totalorder %v166, 16
    %vm175 = vcmp.lt.s32.totalorder %v167, 16
    %vm176 = vmand %vm168, %vm172
    %vm177 = vmand %vm169, %vm173
    %vm178 = vmand %vm170, %vm174
    %vm179 = vmand %vm171, %vm175
    %vm180 = vmand %vm176, %vm84
    %vm181 = vmand %vm177, %vm85
    %vm182 = vmand %vm178, %vm86
    %vm183 = vmand %vm179, %vm87
    %vm184 = vmand %vm180, %vm92
    %vm185 = vmand %vm181, %vm93
    %vm186 = vmand %vm182, %vm94
    %vm187 = vmand %vm183, %vm95
    %vm188 = vmand %vm176, %vm100
    %vm189 = vmand %vm177, %vm101
    %vm190 = vmand %vm178, %vm102
    %vm191 = vmand %vm179, %vm103
    %vm192 = vmand %vm188, %vm108
    %vm193 = vmand %vm189, %vm109
    %vm194 = vmand %vm190, %vm110
    %vm195 = vmand %vm191, %vm111
    %vm196 = vmand %vm176, %vm120
    %vm197 = vmand %vm177, %vm121
    %vm198 = vmand %vm178, %vm122
    %vm199 = vmand %vm179, %vm123
    %vm200 = vmand %vm196, %vm128
    %vm201 = vmand %vm197, %vm129
    %vm202 = vmand %vm198, %vm130
    %vm203 = vmand %vm199, %vm131
    %v204 = vld [vmem:[#allocation2] sm:$0xff]
    %v205 = vld [vmem:[#allocation2 + $0x8] sm:$0xff]
    %v206 = vld [vmem:[#allocation2 + $0x10] sm:$0xff]
    %v207 = vld [vmem:[#allocation2 + $0x18] sm:$0xff]
    %v208 = vld [vmem:[%s1] sm:$0xff]
    %209 = vrot.lane.b32.xlu0 %v204, 17
    %v210 = vpop.permute.xlu0 %209
    %211 = vrot.lane.b32.xlu0 %v205, 17
    %v212 = vpop.permute.xlu0 %211
    %213 = vrot.lane.b32.xlu0 %v206, 17
    %v214 = vpop.permute.xlu0 %213
    %215 = vrot.lane.b32.xlu0 %v207, 17
    %v216 = vpop.permute.xlu0 %215
    %vm217 = vcmp.lt.s32.totalorder %v48, 17
    %v218 = vsel %vm217, %v214, %v216
    %v219 = vsel %vm217, %v212, %v214
    %v220 = vsel %vm217, %v210, %v212
    %v221 = vsel %vm217, %v216, %v210
    %v222 = vsel %vm96, 1, 0
    %v223 = vsel %vm97, 1, 0
    %v224 = vsel %vm98, 1, 0
    %v225 = vsel %vm99, 1, 0
    %vm226 = vcmp.eq.s32.totalorder %v222, 1
    %vm227 = vcmp.eq.s32.totalorder %v223, 1
    %vm228 = vcmp.eq.s32.totalorder %v224, 1
    %vm229 = vcmp.eq.s32.totalorder %v225, 1
    %v230 = vsel %vm226, %v221, 0.0
    %v231 = vsel %vm227, %v220, 0.0
    %v232 = vsel %vm228, %v219, 0.0
    %v233 = vsel %vm229, %v218, 0.0
    %234 = vrot.lane.b32.xlu0 %v204, 16
    %v235 = vpop.permute.xlu0 %234
    %236 = vrot.lane.b32.xlu0 %v205, 16
    %v237 = vpop.permute.xlu0 %236
    %238 = vrot.lane.b32.xlu0 %v206, 16
    %v239 = vpop.permute.xlu0 %238
    %240 = vrot.lane.b32.xlu0 %v207, 16
    %v241 = vpop.permute.xlu0 %240
    %vm242 = vcmp.lt.s32.totalorder %v48, 16
    %v243 = vsel %vm242, %v239, %v241
    %v244 = vsel %vm242, %v237, %v239
    %v245 = vsel %vm242, %v235, %v237
    %v246 = vsel %vm242, %v241, %v235
    %v247 = vsel %vm112, 1, 0
    %v248 = vsel %vm113, 1, 0
    %v249 = vsel %vm114, 1, 0
    %v250 = vsel %vm115, 1, 0
    %vm251 = vcmp.eq.s32.totalorder %v247, 1
    %vm252 = vcmp.eq.s32.totalorder %v248, 1
    %vm253 = vcmp.eq.s32.totalorder %v249, 1
    %vm254 = vcmp.eq.s32.totalorder %v250, 1
    %v255 = vsel %vm251, %v246, 0.0
    %v256 = vsel %vm252, %v245, 0.0
    %v257 = vsel %vm253, %v244, 0.0
    %v258 = vsel %vm254, %v243, 0.0
    %259 = vrot.lane.b32.xlu0 %v204, 15
    %v260 = vpop.permute.xlu0 %259
    %261 = vrot.lane.b32.xlu0 %v205, 15
    %v262 = vpop.permute.xlu0 %261
    %263 = vrot.lane.b32.xlu0 %v206, 15
    %v264 = vpop.permute.xlu0 %263
    %265 = vrot.lane.b32.xlu0 %v207, 15
    %v266 = vpop.permute.xlu0 %265
    %vm267 = vcmp.lt.s32.totalorder %v48, 15
    %v268 = vsel %vm267, %v264, %v266
    %v269 = vsel %vm267, %v262, %v264
    %v270 = vsel %vm267, %v260, %v262
    %v271 = vsel %vm267, %v266, %v260
    %v272 = vsel %vm132, 1, 0
    %v273 = vsel %vm133, 1, 0
    %v274 = vsel %vm134, 1, 0
    %v275 = vsel %vm135, 1, 0
    %vm276 = vcmp.eq.s32.totalorder %v272, 1
    %vm277 = vcmp.eq.s32.totalorder %v273, 1
    %vm278 = vcmp.eq.s32.totalorder %v274, 1
    %vm279 = vcmp.eq.s32.totalorder %v275, 1
    %v280 = vsel %vm276, %v271, 0.0
    %v281 = vsel %vm277, %v270, 0.0
    %v282 = vsel %vm278, %v269, 0.0
    %v283 = vsel %vm279, %v268, 0.0
    %284 = vrot.lane.b32.xlu0 %v204, 1
    %v285 = vpop.permute.xlu0 %284
    %286 = vrot.lane.b32.xlu0 %v205, 1
    %v287 = vpop.permute.xlu0 %286
    %288 = vrot.lane.b32.xlu0 %v206, 1
    %v289 = vpop.permute.xlu0 %288
    %290 = vrot.lane.b32.xlu0 %v207, 1
    %v291 = vpop.permute.xlu0 %290
    %vm292 = vcmp.lt.s32.totalorder %v48, 1
    %v293 = vsel %vm292, %v289, %v291
    %v294 = vsel %vm292, %v287, %v289
    %v295 = vsel %vm292, %v285, %v287
    %v296 = vsel %vm292, %v291, %v285
    %v297 = vsel %vm152, 1, 0
    %v298 = vsel %vm153, 1, 0
    %v299 = vsel %vm154, 1, 0
    %v300 = vsel %vm155, 1, 0
    %vm301 = vcmp.eq.s32.totalorder %v297, 1
    %vm302 = vcmp.eq.s32.totalorder %v298, 1
    %vm303 = vcmp.eq.s32.totalorder %v299, 1
    %vm304 = vcmp.eq.s32.totalorder %v300, 1
    %v305 = vsel %vm301, %v296, 0.0
    %v306 = vsel %vm302, %v295, 0.0
    %v307 = vsel %vm303, %v294, 0.0
    %v308 = vsel %vm304, %v293, 0.0
    %309 = vrot.lane.b32.xlu0 %v204, 127
    %v310 = vpop.permute.xlu0 %309
    %311 = vrot.lane.b32.xlu0 %v205, 127
    %v312 = vpop.permute.xlu0 %311
    %313 = vrot.lane.b32.xlu0 %v206, 127
    %v314 = vpop.permute.xlu0 %313
    %315 = vrot.lane.b32.xlu0 %v207, 127
    %v316 = vpop.permute.xlu0 %315
    %vm317 = vcmp.lt.s32.totalorder %v48, 127
    %v318 = vsel %vm317, %v314, %v316
    %v319 = vsel %vm317, %v312, %v314
    %v320 = vsel %vm317, %v310, %v312
    %v321 = vsel %vm317, %v316, %v310
    %v322 = vsel %vm160, 1, 0
    %v323 = vsel %vm161, 1, 0
    %v324 = vsel %vm162, 1, 0
    %v325 = vsel %vm163, 1, 0
    %vm326 = vcmp.eq.s32.totalorder %v322, 1
    %vm327 = vcmp.eq.s32.totalorder %v323, 1
    %vm328 = vcmp.eq.s32.totalorder %v324, 1
    %vm329 = vcmp.eq.s32.totalorder %v325, 1
    %v330 = vsel %vm326, %v320, 0.0
    %v331 = vsel %vm327, %v319, 0.0
    %v332 = vsel %vm328, %v318, 0.0
    %v333 = vsel %vm329, %v321, 0.0
    %334 = vrot.lane.b32.xlu0 %v204, 113
    %v335 = vpop.permute.xlu0 %334
    %336 = vrot.lane.b32.xlu0 %v205, 113
    %v337 = vpop.permute.xlu0 %336
    %338 = vrot.lane.b32.xlu0 %v206, 113
    %v339 = vpop.permute.xlu0 %338
    %340 = vrot.lane.b32.xlu0 %v207, 113
    %v341 = vpop.permute.xlu0 %340
    %vm342 = vcmp.lt.s32.totalorder %v48, 113
    %v343 = vsel %vm342, %v339, %v341
    %v344 = vsel %vm342, %v337, %v339
    %v345 = vsel %vm342, %v335, %v337
    %v346 = vsel %vm342, %v341, %v335
    %v347 = vsel %vm184, 1, 0
    %v348 = vsel %vm185, 1, 0
    %v349 = vsel %vm186, 1, 0
    %v350 = vsel %vm187, 1, 0
    %vm351 = vcmp.eq.s32.totalorder %v347, 1
    %vm352 = vcmp.eq.s32.totalorder %v348, 1
    %vm353 = vcmp.eq.s32.totalorder %v349, 1
    %vm354 = vcmp.eq.s32.totalorder %v350, 1
    %v355 = vsel %vm351, %v345, 0.0
    %v356 = vsel %vm352, %v344, 0.0
    %v357 = vsel %vm353, %v343, 0.0
    %v358 = vsel %vm354, %v346, 0.0
    %359 = vrot.lane.b32.xlu0 %v204, 112
    %v360 = vpop.permute.xlu0 %359
    %361 = vrot.lane.b32.xlu0 %v205, 112
    %v362 = vpop.permute.xlu0 %361
    %363 = vrot.lane.b32.xlu0 %v206, 112
    %v364 = vpop.permute.xlu0 %363
    %365 = vrot.lane.b32.xlu0 %v207, 112
    %v366 = vpop.permute.xlu0 %365
    %vm367 = vcmp.lt.s32.totalorder %v48, 112
    %v368 = vsel %vm367, %v364, %v366
    %v369 = vsel %vm367, %v362, %v364
    %v370 = vsel %vm367, %v360, %v362
    %v371 = vsel %vm367, %v366, %v360
    %v372 = vsel %vm192, 1, 0
    %v373 = vsel %vm193, 1, 0
    %v374 = vsel %vm194, 1, 0
    %v375 = vsel %vm195, 1, 0
    %vm376 = vcmp.eq.s32.totalorder %v372, 1
    %vm377 = vcmp.eq.s32.totalorder %v373, 1
    %vm378 = vcmp.eq.s32.totalorder %v374, 1
    %vm379 = vcmp.eq.s32.totalorder %v375, 1
    %v380 = vsel %vm376, %v370, 0.0
    %v381 = vsel %vm377, %v369, 0.0
    %v382 = vsel %vm378, %v368, 0.0
    %v383 = vsel %vm379, %v371, 0.0
    %384 = vrot.lane.b32.xlu0 %v204, 111
    %v385 = vpop.permute.xlu0 %384
    %386 = vrot.lane.b32.xlu0 %v205, 111
    %v387 = vpop.permute.xlu0 %386
    %388 = vrot.lane.b32.xlu0 %v206, 111
    %v389 = vpop.permute.xlu0 %388
    %390 = vrot.lane.b32.xlu0 %v207, 111
    %v391 = vpop.permute.xlu0 %390
    %vm392 = vcmp.lt.s32.totalorder %v48, 111
    %v393 = vsel %vm392, %v389, %v391
    %v394 = vsel %vm392, %v387, %v389
    %v395 = vsel %vm392, %v385, %v387
    %v396 = vsel %vm392, %v391, %v385
    %v397 = vsel %vm200, 1, 0
    %v398 = vsel %vm201, 1, 0
    %v399 = vsel %vm202, 1, 0
    %v400 = vsel %vm203, 1, 0
    %vm401 = vcmp.eq.s32.totalorder %v397, 1
    %vm402 = vcmp.eq.s32.totalorder %v398, 1
    %vm403 = vcmp.eq.s32.totalorder %v399, 1
    %vm404 = vcmp.eq.s32.totalorder %v400, 1
    %v405 = vsel %vm401, %v395, 0.0
    %v406 = vsel %vm402, %v394, 0.0
    %v407 = vsel %vm403, %v393, 0.0
    %v408 = vsel %vm404, %v396, 0.0
    %vm409 = vcmask 588800
    %v411 = vsel %vm409, %v208, 0
    %413 = vmatpush.msra.mxu0 0.0
    %414 = vmatpush.msra.mxu0 0.0
    %415 = vmatpush.msra.mxu0 0.0
    %416 = vmatpush.msra.mxu0 0.0
    %417 = vmatpush.msra.mxu0 0.0
    %418 = vmatpush.msra.mxu0 0.0
    %419 = vmatpush.msra.mxu0 0.0
    %420 = vmatpush.msra.mxu0 %v405
    %421 = vmatpush.msra.mxu0 %v380
    %422 = vmatpush.msra.mxu0 %v355
    %423 = vmatpush.msra.mxu0 %v330
    %424 = vmatpush.msra.mxu0 %v204
    %425 = vmatpush.msra.mxu0 %v305
    %426 = vmatpush.msra.mxu0 %v280
    %427 = vmatpush.msra.mxu0 %v255
    %428 = vmatpush.msra.mxu0 %v230
    %429 = vmatmul.f32.gmra.mxu0 %v411
    %v430 = vpop.f32.mrf.mxu0
    %v431 = vadd.f32 0.0, %v430
    %432 = vdwg.mxu0
    %433 = vmatpush.msra.mxu0 0.0
    %434 = vmatpush.msra.mxu0 0.0
    %435 = vmatpush.msra.mxu0 0.0
    %436 = vmatpush.msra.mxu0 0.0
    %437 = vmatpush.msra.mxu0 0.0
    %438 = vmatpush.msra.mxu0 0.0
    %439 = vmatpush.msra.mxu0 0.0
    %440 = vmatpush.msra.mxu0 %v406
    %441 = vmatpush.msra.mxu0 %v381
    %442 = vmatpush.msra.mxu0 %v356
    %443 = vmatpush.msra.mxu0 %v331
    %444 = vmatpush.msra.mxu0 %v205
    %445 = vmatpush.msra.mxu0 %v306
    %446 = vmatpush.msra.mxu0 %v281
    %447 = vmatpush.msra.mxu0 %v256
    %448 = vmatpush.msra.mxu0 %v231
    %449 = vmatmul.f32.gmra.mxu0 %v411
    %v450 = vpop.f32.mrf.mxu0
    %v451 = vadd.f32 0.0, %v450
    %452 = vdwg.mxu0
    %453 = vmatpush.msra.mxu0 0.0
    %454 = vmatpush.msra.mxu0 0.0
    %455 = vmatpush.msra.mxu0 0.0
    %456 = vmatpush.msra.mxu0 0.0
    %457 = vmatpush.msra.mxu0 0.0
    %458 = vmatpush.msra.mxu0 0.0
    %459 = vmatpush.msra.mxu0 0.0
    %460 = vmatpush.msra.mxu0 %v407
    %461 = vmatpush.msra.mxu0 %v382
    %462 = vmatpush.msra.mxu0 %v357
    %463 = vmatpush.msra.mxu0 %v332
    %464 = vmatpush.msra.mxu0 %v206
    %465 = vmatpush.msra.mxu0 %v307
    %466 = vmatpush.msra.mxu0 %v282
    %467 = vmatpush.msra.mxu0 %v257
    %468 = vmatpush.msra.mxu0 %v232
    %469 = vmatmul.f32.gmra.mxu0 %v411
    %v470 = vpop.f32.mrf.mxu0
    %v471 = vadd.f32 0.0, %v470
    %472 = vdwg.mxu0
    %473 = vmatpush.msra.mxu0 0.0
    %474 = vmatpush.msra.mxu0 0.0
    %475 = vmatpush.msra.mxu0 0.0
    %476 = vmatpush.msra.mxu0 0.0
    %477 = vmatpush.msra.mxu0 0.0
    %478 = vmatpush.msra.mxu0 0.0
    %479 = vmatpush.msra.mxu0 0.0
    %480 = vmatpush.msra.mxu0 %v408
    %481 = vmatpush.msra.mxu0 %v383
    %482 = vmatpush.msra.mxu0 %v358
    %483 = vmatpush.msra.mxu0 %v333
    %484 = vmatpush.msra.mxu0 %v207
    %485 = vmatpush.msra.mxu0 %v308
    %486 = vmatpush.msra.mxu0 %v283
    %487 = vmatpush.msra.mxu0 %v258
    %488 = vmatpush.msra.mxu0 %v233
    %489 = vmatmul.f32.gmra.mxu0 %v411
    %v490 = vpop.f32.mrf.mxu0
    %v491 = vadd.f32 0.0, %v490
    %492 = vdwg.mxu0
    %v493 = vld [vmem:[%s2] sm:$0xff]
    %v494 = vld [vmem:[%s3] sm:$0xff]
    %v495 = vmul.f32 %v431, %v431
    %v496 = vmul.f32 %v451, %v451
    %v497 = vmul.f32 %v471, %v471
    %v498 = vmul.f32 %v491, %v491
    %v499 = vadd.f32 %v431, %v451
    %v500 = vadd.f32 %v499, %v471
    %v501 = vadd.f32 %v500, %v491
    %502 = vadd.xlane.f32.xlu0 %v501
    %v503 = vpop.xlane.xlu0 %502
    %v504 = vadd.f32 %v495, %v496
    %v505 = vadd.f32 %v504, %v497
    %v506 = vadd.f32 %v505, %v498
    %507 = vadd.xlane.f32.xlu0 %v506
    %v508 = vpop.xlane.xlu0 %507
    %v509 = vmul.f32 %v503, 0.001953125
    %v510 = vmul.f32 %v508, 0.001953125
    %v511 = vmul.f32 %v509, %v509
    %v512 = vsub.f32 %v510, %v511
    %v513 = vmax.f32 %v512, 0.0
    %v514 = vadd.f32 %v513, 1e-05
    %v515 = vrsqrt.pop %v514
    %v516 = vmul.f32 %v515, %v514
    %v517 = vmul.f32 %v516, %v515
    %v518 = vmul.f32 0.5, %v517
    %v519 = vsub.f32 1.5, %v518
    %v520 = vmul.f32 %v515, %v519
    %vm521 = vweird.f32 %v514
    %vm522 = vweird.f32 %v515
    %vm523 = vmor %vm521, %vm522
    %v524 = vsel %vm523, %v515, %v520
    %v525 = vmul.f32 %v493, %v524
    %v526 = vmul.f32 %v509, %v525
    %v527 = vsub.f32 %v494, %v526
    %529 = vset.pattern.permute.xlu0 0
    %530 = vperm.xlu0 %529, %v525
    %v531 = vpop.permute.xlu0 %530
    %v533 = vmul.f32 %v431, %v531
    %v534 = vmul.f32 %v451, %v531
    %v535 = vmul.f32 %v471, %v531
    %v536 = vmul.f32 %v491, %v531
    %538 = vset.pattern.permute.xlu0 0
    %539 = vperm.xlu0 %538, %v527
    %v540 = vpop.permute.xlu0 %539
    %v542 = vadd.f32 %v533, %v540
    %v543 = vadd.f32 %v534, %v540
    %v544 = vadd.f32 %v535, %v540
    %v545 = vadd.f32 %v536, %v540
    %v546 = vmax.f32 %v542, 0.0
    %v547 = vmax.f32 %v543, 0.0
    %v548 = vmax.f32 %v544, 0.0
    %v549 = vmax.f32 %v545, 0.0
    %v550 = vld [vmem:[%s4] sm:$0xff]
    %551 = vrot.lane.b32.xlu0 %v546, 17
    %v552 = vpop.permute.xlu0 %551
    %553 = vrot.lane.b32.xlu0 %v547, 17
    %v554 = vpop.permute.xlu0 %553
    %555 = vrot.lane.b32.xlu0 %v548, 17
    %v556 = vpop.permute.xlu0 %555
    %557 = vrot.lane.b32.xlu0 %v549, 17
    %v558 = vpop.permute.xlu0 %557
    %v559 = vsel %vm217, %v556, %v558
    %v560 = vsel %vm217, %v554, %v556
    %v561 = vsel %vm217, %v552, %v554
    %v562 = vsel %vm217, %v558, %v552
    %v563 = vsel %vm226, %v562, 0.0
    %v564 = vsel %vm227, %v561, 0.0
    %v565 = vsel %vm228, %v560, 0.0
    %v566 = vsel %vm229, %v559, 0.0
    %567 = vrot.lane.b32.xlu0 %v546, 16
    %v568 = vpop.permute.xlu0 %567
    %569 = vrot.lane.b32.xlu0 %v547, 16
    %v570 = vpop.permute.xlu0 %569
    %571 = vrot.lane.b32.xlu0 %v548, 16
    %v572 = vpop.permute.xlu0 %571
    %573 = vrot.lane.b32.xlu0 %v549, 16
    %v574 = vpop.permute.xlu0 %573
    %v575 = vsel %vm242, %v572, %v574
    %v576 = vsel %vm242, %v570, %v572
    %v577 = vsel %vm242, %v568, %v570
    %v578 = vsel %vm242, %v574, %v568
    %v579 = vsel %vm251, %v578, 0.0
    %v580 = vsel %vm252, %v577, 0.0
    %v581 = vsel %vm253, %v576, 0.0
    %v582 = vsel %vm254, %v575, 0.0
    %583 = vrot.lane.b32.xlu0 %v546, 15
    %v584 = vpop.permute.xlu0 %583
    %585 = vrot.lane.b32.xlu0 %v547, 15
    %v586 = vpop.permute.xlu0 %585
    %587 = vrot.lane.b32.xlu0 %v548, 15
    %v588 = vpop.permute.xlu0 %587
    %589 = vrot.lane.b32.xlu0 %v549, 15
    %v590 = vpop.permute.xlu0 %589
    %v591 = vsel %vm267, %v588, %v590
    %v592 = vsel %vm267, %v586, %v588
    %v593 = vsel %vm267, %v584, %v586
    %v594 = vsel %vm267, %v590, %v584
    %v595 = vsel %vm276, %v594, 0.0
    %v596 = vsel %vm277, %v593, 0.0
    %v597 = vsel %vm278, %v592, 0.0
    %v598 = vsel %vm279, %v591, 0.0
    %599 = vrot.lane.b32.xlu0 %v546, 1
    %v600 = vpop.permute.xlu0 %599
    %601 = vrot.lane.b32.xlu0 %v547, 1
    %v602 = vpop.permute.xlu0 %601
    %603 = vrot.lane.b32.xlu0 %v548, 1
    %v604 = vpop.permute.xlu0 %603
    %605 = vrot.lane.b32.xlu0 %v549, 1
    %v606 = vpop.permute.xlu0 %605
    %v607 = vsel %vm292, %v604, %v606
    %v608 = vsel %vm292, %v602, %v604
    %v609 = vsel %vm292, %v600, %v602
    %v610 = vsel %vm292, %v606, %v600
    %v611 = vsel %vm301, %v610, 0.0
    %v612 = vsel %vm302, %v609, 0.0
    %v613 = vsel %vm303, %v608, 0.0
    %v614 = vsel %vm304, %v607, 0.0
    %615 = vrot.lane.b32.xlu0 %v546, 127
    %v616 = vpop.permute.xlu0 %615
    %617 = vrot.lane.b32.xlu0 %v547, 127
    %v618 = vpop.permute.xlu0 %617
    %619 = vrot.lane.b32.xlu0 %v548, 127
    %v620 = vpop.permute.xlu0 %619
    %621 = vrot.lane.b32.xlu0 %v549, 127
    %v622 = vpop.permute.xlu0 %621
    %v623 = vsel %vm317, %v620, %v622
    %v624 = vsel %vm317, %v618, %v620
    %v625 = vsel %vm317, %v616, %v618
    %v626 = vsel %vm317, %v622, %v616
    %v627 = vsel %vm326, %v625, 0.0
    %v628 = vsel %vm327, %v624, 0.0
    %v629 = vsel %vm328, %v623, 0.0
    %v630 = vsel %vm329, %v626, 0.0
    %631 = vrot.lane.b32.xlu0 %v546, 113
    %v632 = vpop.permute.xlu0 %631
    %633 = vrot.lane.b32.xlu0 %v547, 113
    %v634 = vpop.permute.xlu0 %633
    %635 = vrot.lane.b32.xlu0 %v548, 113
    %v636 = vpop.permute.xlu0 %635
    %637 = vrot.lane.b32.xlu0 %v549, 113
    %v638 = vpop.permute.xlu0 %637
    %v639 = vsel %vm342, %v636, %v638
    %v640 = vsel %vm342, %v634, %v636
    %v641 = vsel %vm342, %v632, %v634
    %v642 = vsel %vm342, %v638, %v632
    %v643 = vsel %vm351, %v641, 0.0
    %v644 = vsel %vm352, %v640, 0.0
    %v645 = vsel %vm353, %v639, 0.0
    %v646 = vsel %vm354, %v642, 0.0
    %647 = vrot.lane.b32.xlu0 %v546, 112
    %v648 = vpop.permute.xlu0 %647
    %649 = vrot.lane.b32.xlu0 %v547, 112
    %v650 = vpop.permute.xlu0 %649
    %651 = vrot.lane.b32.xlu0 %v548, 112
    %v652 = vpop.permute.xlu0 %651
    %653 = vrot.lane.b32.xlu0 %v549, 112
    %v654 = vpop.permute.xlu0 %653
    %v655 = vsel %vm367, %v652, %v654
    %v656 = vsel %vm367, %v650, %v652
    %v657 = vsel %vm367, %v648, %v650
    %v658 = vsel %vm367, %v654, %v648
    %v659 = vsel %vm376, %v657, 0.0
    %v660 = vsel %vm377, %v656, 0.0
    %v661 = vsel %vm378, %v655, 0.0
    %v662 = vsel %vm379, %v658, 0.0
    %663 = vrot.lane.b32.xlu0 %v546, 111
    %v664 = vpop.permute.xlu0 %663
    %665 = vrot.lane.b32.xlu0 %v547, 111
    %v666 = vpop.permute.xlu0 %665
    %667 = vrot.lane.b32.xlu0 %v548, 111
    %v668 = vpop.permute.xlu0 %667
    %669 = vrot.lane.b32.xlu0 %v549, 111
    %v670 = vpop.permute.xlu0 %669
    %v671 = vsel %vm392, %v668, %v670
    %v672 = vsel %vm392, %v666, %v668
    %v673 = vsel %vm392, %v664, %v666
    %v674 = vsel %vm392, %v670, %v664
    %v675 = vsel %vm401, %v673, 0.0
    %v676 = vsel %vm402, %v672, 0.0
    %v677 = vsel %vm403, %v671, 0.0
    %v678 = vsel %vm404, %v674, 0.0
    %v680 = vsel %vm409, %v550, 0
    %682 = vmatpush.msra.mxu0 0.0
    %683 = vmatpush.msra.mxu0 0.0
    %684 = vmatpush.msra.mxu0 0.0
    %685 = vmatpush.msra.mxu0 0.0
    %686 = vmatpush.msra.mxu0 0.0
    %687 = vmatpush.msra.mxu0 0.0
    %688 = vmatpush.msra.mxu0 0.0
    %689 = vmatpush.msra.mxu0 %v675
    %690 = vmatpush.msra.mxu0 %v659
    %691 = vmatpush.msra.mxu0 %v643
    %692 = vmatpush.msra.mxu0 %v627
    %693 = vmatpush.msra.mxu0 %v546
    %694 = vmatpush.msra.mxu0 %v611
    %695 = vmatpush.msra.mxu0 %v595
    %696 = vmatpush.msra.mxu0 %v579
    %697 = vmatpush.msra.mxu0 %v563
    %698 = vmatmul.f32.gmra.mxu0 %v680
    %v699 = vpop.f32.mrf.mxu0
    %v700 = vadd.f32 0.0, %v699
    %701 = vdwg.mxu0
    %702 = vmatpush.msra.mxu0 0.0
    %703 = vmatpush.msra.mxu0 0.0
    %704 = vmatpush.msra.mxu0 0.0
    %705 = vmatpush.msra.mxu0 0.0
    %706 = vmatpush.msra.mxu0 0.0
    %707 = vmatpush.msra.mxu0 0.0
    %708 = vmatpush.msra.mxu0 0.0
    %709 = vmatpush.msra.mxu0 %v676
    %710 = vmatpush.msra.mxu0 %v660
    %711 = vmatpush.msra.mxu0 %v644
    %712 = vmatpush.msra.mxu0 %v628
    %713 = vmatpush.msra.mxu0 %v547
    %714 = vmatpush.msra.mxu0 %v612
    %715 = vmatpush.msra.mxu0 %v596
    %716 = vmatpush.msra.mxu0 %v580
    %717 = vmatpush.msra.mxu0 %v564
    %718 = vmatmul.f32.gmra.mxu0 %v680
    %v719 = vpop.f32.mrf.mxu0
    %v720 = vadd.f32 0.0, %v719
    %721 = vdwg.mxu0
    %722 = vmatpush.msra.mxu0 0.0
    %723 = vmatpush.msra.mxu0 0.0
    %724 = vmatpush.msra.mxu0 0.0
    %725 = vmatpush.msra.mxu0 0.0
    %726 = vmatpush.msra.mxu0 0.0
    %727 = vmatpush.msra.mxu0 0.0
    %728 = vmatpush.msra.mxu0 0.0
    %729 = vmatpush.msra.mxu0 %v677
    %730 = vmatpush.msra.mxu0 %v661
    %731 = vmatpush.msra.mxu0 %v645
    %732 = vmatpush.msra.mxu0 %v629
    %733 = vmatpush.msra.mxu0 %v548
    %734 = vmatpush.msra.mxu0 %v613
    %735 = vmatpush.msra.mxu0 %v597
    %736 = vmatpush.msra.mxu0 %v581
    %737 = vmatpush.msra.mxu0 %v565
    %738 = vmatmul.f32.gmra.mxu0 %v680
    %v739 = vpop.f32.mrf.mxu0
    %v740 = vadd.f32 0.0, %v739
    %741 = vdwg.mxu0
    %742 = vmatpush.msra.mxu0 0.0
    %743 = vmatpush.msra.mxu0 0.0
    %744 = vmatpush.msra.mxu0 0.0
    %745 = vmatpush.msra.mxu0 0.0
    %746 = vmatpush.msra.mxu0 0.0
    %747 = vmatpush.msra.mxu0 0.0
    %748 = vmatpush.msra.mxu0 0.0
    %749 = vmatpush.msra.mxu0 %v678
    %750 = vmatpush.msra.mxu0 %v662
    %751 = vmatpush.msra.mxu0 %v646
    %752 = vmatpush.msra.mxu0 %v630
    %753 = vmatpush.msra.mxu0 %v549
    %754 = vmatpush.msra.mxu0 %v614
    %755 = vmatpush.msra.mxu0 %v598
    %756 = vmatpush.msra.mxu0 %v582
    %757 = vmatpush.msra.mxu0 %v566
    %758 = vmatmul.f32.gmra.mxu0 %v680
    %v759 = vpop.f32.mrf.mxu0
    %v760 = vadd.f32 0.0, %v759
    %761 = vdwg.mxu0
    %v762 = vld [vmem:[%s5] sm:$0xff]
    %v763 = vld [vmem:[%s6] sm:$0xff]
    %v764 = vmul.f32 %v700, %v700
    %v765 = vmul.f32 %v720, %v720
    %v766 = vmul.f32 %v740, %v740
    %v767 = vmul.f32 %v760, %v760
    %v768 = vadd.f32 %v700, %v720
    %v769 = vadd.f32 %v768, %v740
    %v770 = vadd.f32 %v769, %v760
    %771 = vadd.xlane.f32.xlu0 %v770
    %v772 = vpop.xlane.xlu0 %771
    %v773 = vadd.f32 %v764, %v765
    %v774 = vadd.f32 %v773, %v766
    %v775 = vadd.f32 %v774, %v767
    %776 = vadd.xlane.f32.xlu0 %v775
    %v777 = vpop.xlane.xlu0 %776
    %v778 = vmul.f32 %v772, 0.001953125
    %v779 = vmul.f32 %v777, 0.001953125
    %v780 = vmul.f32 %v778, %v778
    %v781 = vsub.f32 %v779, %v780
    %v782 = vmax.f32 %v781, 0.0
    %v783 = vadd.f32 %v782, 1e-05
    %v784 = vrsqrt.pop %v783
    %v785 = vmul.f32 %v784, %v783
    %v786 = vmul.f32 %v785, %v784
    %v787 = vmul.f32 0.5, %v786
    %v788 = vsub.f32 1.5, %v787
    %v789 = vmul.f32 %v784, %v788
    %vm790 = vweird.f32 %v783
    %vm791 = vweird.f32 %v784
    %vm792 = vmor %vm790, %vm791
    %v793 = vsel %vm792, %v784, %v789
    %v794 = vmul.f32 %v762, %v793
    %v795 = vmul.f32 %v778, %v794
    %v796 = vsub.f32 %v763, %v795
    %v797 = vld [vmem:[%s7] sm:$0xff]
    %vm798 = vcmask 64512
    %v800 = vsel %vm798, %v797, 0
    %802 = vmatpush.msra.mxu0 0.0
    %803 = vmatpush.msra.mxu0 0.0
    %804 = vmatpush.msra.mxu0 0.0
    %805 = vmatpush.msra.mxu0 0.0
    %806 = vmatpush.msra.mxu0 0.0
    %807 = vmatpush.msra.mxu0 0.0
    %808 = vmatpush.msra.mxu0 0.0
    %809 = vmatpush.msra.mxu0 0.0
    %810 = vmatpush.msra.mxu0 0.0
    %811 = vmatpush.msra.mxu0 0.0
    %812 = vmatpush.msra.mxu0 0.0
    %813 = vmatpush.msra.mxu0 0.0
    %814 = vmatpush.msra.mxu0 0.0
    %815 = vmatpush.msra.mxu0 0.0
    %816 = vmatpush.msra.mxu0 0.0
    %817 = vmatpush.msra.mxu0 %v204
    %818 = vmatmul.f32.gmra.mxu0 %v800
    %v819 = vpop.f32.mrf.mxu0
    %v820 = vadd.f32 0.0, %v819
    %821 = vdwg.mxu0
    %822 = vmatpush.msra.mxu0 0.0
    %823 = vmatpush.msra.mxu0 0.0
    %824 = vmatpush.msra.mxu0 0.0
    %825 = vmatpush.msra.mxu0 0.0
    %826 = vmatpush.msra.mxu0 0.0
    %827 = vmatpush.msra.mxu0 0.0
    %828 = vmatpush.msra.mxu0 0.0
    %829 = vmatpush.msra.mxu0 0.0
    %830 = vmatpush.msra.mxu0 0.0
    %831 = vmatpush.msra.mxu0 0.0
    %832 = vmatpush.msra.mxu0 0.0
    %833 = vmatpush.msra.mxu0 0.0
    %834 = vmatpush.msra.mxu0 0.0
    %835 = vmatpush.msra.mxu0 0.0
    %836 = vmatpush.msra.mxu0 0.0
    %837 = vmatpush.msra.mxu0 %v205
    %838 = vmatmul.f32.gmra.mxu0 %v800
    %v839 = vpop.f32.mrf.mxu0
    %v840 = vadd.f32 0.0, %v839
    %841 = vdwg.mxu0
    %842 = vmatpush.msra.mxu0 0.0
    %843 = vmatpush.msra.mxu0 0.0
    %844 = vmatpush.msra.mxu0 0.0
    %845 = vmatpush.msra.mxu0 0.0
    %846 = vmatpush.msra.mxu0 0.0
    %847 = vmatpush.msra.mxu0 0.0
    %848 = vmatpush.msra.mxu0 0.0
    %849 = vmatpush.msra.mxu0 0.0
    %850 = vmatpush.msra.mxu0 0.0
    %851 = vmatpush.msra.mxu0 0.0
    %852 = vmatpush.msra.mxu0 0.0
    %853 = vmatpush.msra.mxu0 0.0
    %854 = vmatpush.msra.mxu0 0.0
    %855 = vmatpush.msra.mxu0 0.0
    %856 = vmatpush.msra.mxu0 0.0
    %857 = vmatpush.msra.mxu0 %v206
    %858 = vmatmul.f32.gmra.mxu0 %v800
    %v859 = vpop.f32.mrf.mxu0
    %v860 = vadd.f32 0.0, %v859
    %861 = vdwg.mxu0
    %862 = vmatpush.msra.mxu0 0.0
    %863 = vmatpush.msra.mxu0 0.0
    %864 = vmatpush.msra.mxu0 0.0
    %865 = vmatpush.msra.mxu0 0.0
    %866 = vmatpush.msra.mxu0 0.0
    %867 = vmatpush.msra.mxu0 0.0
    %868 = vmatpush.msra.mxu0 0.0
    %869 = vmatpush.msra.mxu0 0.0
    %870 = vmatpush.msra.mxu0 0.0
    %871 = vmatpush.msra.mxu0 0.0
    %872 = vmatpush.msra.mxu0 0.0
    %873 = vmatpush.msra.mxu0 0.0
    %874 = vmatpush.msra.mxu0 0.0
    %875 = vmatpush.msra.mxu0 0.0
    %876 = vmatpush.msra.mxu0 0.0
    %877 = vmatpush.msra.mxu0 %v207
    %878 = vmatmul.f32.gmra.mxu0 %v800
    %v879 = vpop.f32.mrf.mxu0
    %v880 = vadd.f32 0.0, %v879
    %881 = vdwg.mxu0
    %883 = vset.pattern.permute.xlu0 0
    %884 = vperm.xlu0 %883, %v794
    %v885 = vpop.permute.xlu0 %884
    %v887 = vmul.f32 %v700, %v885
    %v888 = vmul.f32 %v720, %v885
    %v889 = vmul.f32 %v740, %v885
    %v890 = vmul.f32 %v760, %v885
    %v891 = vld [vmem:[%s8] sm:$0xff]
    %v892 = vadd.f32 %v796, %v891
    %894 = vset.pattern.permute.xlu0 0
    %895 = vperm.xlu0 %894, %v892
    %v896 = vpop.permute.xlu0 %895
    %v898 = vadd.f32 %v887, %v896
    %v899 = vadd.f32 %v888, %v896
    %v900 = vadd.f32 %v889, %v896
    %v901 = vadd.f32 %v890, %v896
    %v902 = vadd.f32 %v898, %v820
    %v903 = vadd.f32 %v899, %v840
    %v904 = vadd.f32 %v900, %v860
    %v905 = vadd.f32 %v901, %v880
    %906 = vst [vmem:[#allocation5] sm:$0xff] %v902
    %907 = vst [vmem:[#allocation5 + $0x8] sm:$0xff] %v903
    %908 = vst [vmem:[#allocation5 + $0x10] sm:$0xff] %v904
    %909 = vst [vmem:[#allocation5 + $0x18] sm:$0xff] %v905
    // Predicated region
    $region42: #{tpu_custom_call.1} parent=1 // pred_check
      _
    $region43: #{tpu_custom_call.1} parent=1 // pred_check_branch
      %911 = sbr.rel (0) target = $region45
    $region44: #{tpu_custom_call.1} parent=1 // pred_region
      %913 = vsyncadd [#allocation4], 0
      %s915 = sshll.u32 [#allocation5], 4
      %s916 = int_to_ptr.vmem [resolvable:$true] %s915
      %s917 = sshll.u32 %s9, 4
      %s918 = int_to_ptr.hbm [resolvable:$true] %s917
      %920 = dma.vmem_to_hbm [thread:$0]  %s916, 512, %s918, [#allocation4]
    $region45: #{tpu_custom_call.1} parent=1 // pred_fallthru
      _
    // Predicated region
    $region46: #{tpu_custom_call.1} parent=1 // pred_check
      _
    $region47: #{tpu_custom_call.1} parent=1 // pred_check_branch
      %922 = sbr.rel (0) target = $region49
    $region48: #{tpu_custom_call.1} parent=1 // pred_region
      %924 = dma.done [#allocation4], 512
    $region49: #{tpu_custom_call.1} parent=1 // pred_fallthru
      _
    %925 = vsyncpa [#allocation3], 1
    %926 = vsyncpa [#allocation4], 1

</llo_original>
